<compile_context>
chip_gen: v5e
topology: v5e:2x2
jax: 0.10.0
libtpu: 0.0.40
codegen_flags: <defaults>
</compile_context>

<pallas_src>
import math
import numpy as np
import jax
import jax.numpy as jnp
from jax.experimental import pallas as pl
from jax.experimental.pallas import tpu as pltpu


# ----------------------------- Pallas kernel ------------------------------ #

def ppm_fused_kernel(x_ref, pt_ref, inv_ref, w_ref, bias_ref, ut_ref, o_ref):
    """One grid step == one image; all pyramid branches fused.

    x_ref:    (1, Cin, HW)        bf16  input image, channel rows, lane-dense spatial
    pt_ref:   (HW, B*pqm)         bf16  {0,1} pooling membership, all branches (bin-padded)
    inv_ref:  (1, B*pqm)          f32   exact per-bin 1/count (ceil-mode clipped divisor)
    w_ref:    (B, Cout, Cin)      bf16  1x1 conv weights with BN scale folded in
    bias_ref: (Cout, B)           f32   folded BN bias, one column per branch
    ut_ref:   (B, pqm, HW)        bf16  bilinear(align_corners) upsample operators, transposed
    o_ref:    (1, Cin+B*Cout, HW) bf16  torch.cat([x, branch_0..branch_{B-1}], dim=1)
    """
    B, pqm, HW = ut_ref.shape
    Cout = w_ref.shape[1]
    Cin = x_ref.shape[1]

    x = x_ref[0]                                                        # (Cin, HW) bf16

    # Channel passthrough: first Cin output channels are x itself (torch.cat).
    o_ref[0, 0:Cin, :] = x.astype(o_ref.dtype)

    # Batched ceil-mode AvgPool2d over ALL branches: one wide MXU pass
    # (N = B*pqm) instead of B narrow passes.  Membership matrix is {0,1}
    # (bf16-exact); the averaging divisor is applied afterwards in f32.
    pooled = jnp.dot(x, pt_ref[...], preferred_element_type=jnp.float32)    # (Cin, B*pqm)
    pooled = pooled * inv_ref[...]                                           # f32, bcast (1, B*pqm)

    for b in range(B):   # B is small & static -> unrolled, all slices static
        p_b = pooled[:, b * pqm:(b + 1) * pqm].astype(w_ref.dtype)           # (Cin, pqm) bf16
        # 1x1 Conv2d (BN scale pre-folded into w) with f32 MXU accumulation.
        z = jnp.dot(w_ref[b], p_b, preferred_element_type=jnp.float32)       # (Cout, pqm)
        # BN bias + ReLU in f32 on the VPU.
        a = jnp.maximum(z + bias_ref[:, b:b + 1], 0.0)
        # UpsamplingBilinear2d(align_corners=True) as an MXU matmul; zero rows
        # for padded bins never reach the output.
        up = jnp.dot(a.astype(ut_ref.dtype), ut_ref[b],
                     preferred_element_type=jnp.float32)                     # (Cout, HW)
        o_ref[0, Cin + b * Cout:Cin + (b + 1) * Cout, :] = up.astype(o_ref.dtype)


# ------------------------- operator-matrix glue ---------------------------- #

def _avgpool_1d(n_in, s):
    """1-D membership {0,1} matrix + exact 1/count for
    AvgPool2d(kernel=stride=ceil(n/s), ceil_mode=True, padding=0)."""
    k = int(math.ceil(float(n_in) / s))
    stride = k
    n_out = int(math.ceil(float(n_in - k) / stride)) + 1
    if (n_out - 1) * stride >= n_in:      # torch drops windows starting past the input (pad=0)
        n_out -= 1
    m = np.zeros((n_out, n_in), np.float32)
    inv = np.zeros((n_out,), np.float32)
    for i in range(n_out):
        lo = i * stride
        hi = min(lo + k, n_in)            # ceil-mode edge windows are clipped; divisor = count
        m[i, lo:hi] = 1.0
        inv[i] = 1.0 / (hi - lo)
    return m, inv


def _bilinear_1d(n_out, n_in):
    """1-D interpolation operator for UpsamplingBilinear2d (align_corners=True)."""
    m = np.zeros((n_out, n_in), np.float32)
    if n_in == 1 or n_out == 1:
        m[:, 0] = 1.0
        return m
    scale = (n_in - 1) / (n_out - 1)
    for i in range(n_out):
        src = i * scale
        i0 = min(int(math.floor(src)), n_in - 1)
        i1 = min(i0 + 1, n_in - 1)
        f = src - i0
        m[i, i0] += 1.0 - f
        m[i, i1] += f
    return m


def init_ppm_params(key, in_size, in_channels, out_channels, setting):
    """Deterministic synthetic parameters.

    Returns (kernel_params, master):
      kernel_params: packed / quantized operands fed to the Pallas kernel.
      master:        exact f32 operators & weights for the reference check.
    """
    H, W = in_size
    HW = H * W
    B = len(setting)
    eps = 1e-5

    # Exact PyTorch-semantics spatial operators per branch.
    pool_bin, pool_inv, up_mats = [], [], []
    for s in setting:
        mh, ih = _avgpool_1d(H, s)
        mw, iw = _avgpool_1d(W, s)
        pool_bin.append(np.kron(mh, mw))          # (pq, HW) {0,1}
        pool_inv.append(np.kron(ih, iw))          # (pq,)    1/(clipped window size)
        uh = _bilinear_1d(H, mh.shape[0])
        uw = _bilinear_1d(W, mw.shape[0])
        up_mats.append(np.kron(uh, uw))           # (HW, pq)
    pqm = max(p.shape[0] for p in pool_bin)

    # Pack all branches: membership (HW, B*pqm), 1/count (1, B*pqm), U^T (B, pqm, HW).
    Pt = np.zeros((HW, B * pqm), np.float32)
    inv_all = np.ones((1, B * pqm), np.float32)
    Ut = np.zeros((B, pqm, HW), np.float32)
    for b in range(B):
        pq = pool_bin[b].shape[0]
        Pt[:, b * pqm:b * pqm + pq] = pool_bin[b].T
        inv_all[0, b * pqm:b * pqm + pq] = pool_inv[b]
        Ut[b, :pq, :] = up_mats[b].T              # zero rows for padded bins

    # Conv + BatchNorm (inference) parameters; fold BN scale into the conv weight.
    Wc, gam, bet, rm, rv = [], [], [], [], []
    for _ in setting:
        key, kw, kg, kb, km, kv = jax.random.split(key, 6)
        Wc.append(0.1 * jax.random.normal(kw, (out_channels, in_channels), jnp.float32))
        gam.append(1.0 + 0.1 * jax.random.normal(kg, (out_channels,), jnp.float32))
        bet.append(0.1 * jax.random.normal(kb, (out_channels,), jnp.float32))
        rm.append(0.1 * jax.random.normal(km, (out_channels,), jnp.float32))
        rv.append(jax.random.uniform(kv, (out_channels,), jnp.float32, 0.5, 1.5))
    Wc = jnp.stack(Wc)                                             # (B, Cout, Cin)
    gam, bet, rm, rv = map(jnp.stack, (gam, bet, rm, rv))          # (B, Cout)
    scale = gam / jnp.sqrt(rv + eps)
    bias = bet - rm * scale                                        # (B, Cout) f32
    W_folded = scale[:, :, None] * Wc                              # (B, Cout, Cin) f32

    kernel_params = dict(
        Pt=jnp.asarray(Pt, jnp.bfloat16),          # (HW, B*pqm)   {0,1} -> bf16-exact
        inv=jnp.asarray(inv_all, jnp.float32),     # (1, B*pqm)
        W=W_folded.astype(jnp.bfloat16),           # (B, Cout, Cin)
        bias=jnp.asarray(bias.T, jnp.float32),     # (Cout, B)     one column per branch
        Ut=jnp.asarray(Ut, jnp.bfloat16),          # (B, pqm, HW)
    )
    master = dict(
        P_exact=[jnp.asarray(pool_inv[b][:, None] * pool_bin[b], jnp.float32) for b in range(B)],
        U_exact=[jnp.asarray(up_mats[b], jnp.float32) for b in range(B)],
        W_folded=W_folded,                         # f32
        bias=bias,                                 # f32
    )
    return kernel_params, master


# ------------------------------- wrapper ----------------------------------- #

def pyramid_pooling_module(x_nchw, params):
    """Returns torch.cat([x, branch_0..branch_{B-1}], dim=1) in bf16, shape (N, Cin+B*Cout, H, W)."""
    N, Cin, H, W = x_nchw.shape
    HW = H * W
    Bpq = params["Pt"].shape[1]
    B, Cout, _ = params["W"].shape
    pqm = params["Ut"].shape[1]
    assert Bpq == B * pqm
    Ctot = Cin + B * Cout

    x_flat = x_nchw.reshape(N, Cin, HW).astype(jnp.bfloat16)       # free reshape, lane-dense

    # Explicit scoped-VMEM budget (review item): rough working set * headroom,
    # clamped to [32 MiB, 100 MiB].  For the toy shapes this lands at 32 MiB,
    # which is safe on every chip; re-derive (and HW-tile) for production v7x.
    working = (2 * (Cin * HW * 2 + Ctot * HW * 2)                  # x / out blocks, double-buffered
               + 2 * (HW * Bpq * 2 + Bpq * 4 + B * Cout * Cin * 2
                      + Cout * B * 4 + B * pqm * HW * 2)           # resident operators
               + Cin * Bpq * 4)                                    # pooled f32 intermediate
    vmem_limit = int(min(max(2 * working, 32 * 1024 * 1024), 100 * 1024 * 1024))

    out = pl.pallas_call(
        ppm_fused_kernel,
        out_shape=jax.ShapeDtypeStruct((N, Ctot, HW), jnp.bfloat16),   # bf16 output: half the writeback
        grid_spec=pltpu.PrefetchScalarGridSpec(
            num_scalar_prefetch=0,
            grid=(N,),                                             # one step per image; branches fused inside
            in_specs=[
                pl.BlockSpec((1, Cin, HW), lambda n: (n, 0, 0)),   # x: per-image
                pl.BlockSpec((HW, Bpq), lambda n: (0, 0)),         # constant index maps -> loaded once,
                pl.BlockSpec((1, Bpq), lambda n: (0, 0)),          # VMEM-resident for the whole grid
                pl.BlockSpec((B, Cout, Cin), lambda n: (0, 0, 0)),
                pl.BlockSpec((Cout, B), lambda n: (0, 0)),
                pl.BlockSpec((B, pqm, HW), lambda n: (0, 0, 0)),
            ],
            out_specs=pl.BlockSpec((1, Ctot, HW), lambda n: (n, 0, 0)),
        ),
        compiler_params=pltpu.CompilerParams(
            dimension_semantics=("parallel",),                     # megacore shards over batch only
            vmem_limit_bytes=vmem_limit,
        ),
    )(x_flat, params["Pt"], params["inv"], params["W"], params["bias"], params["Ut"])

    return out.reshape(N, Ctot, H, W)                              # free reshape; no concat needed


# ------------------------------ references --------------------------------- #

def _reference_matched(x_nchw, params):
    """Pure-JAX reference with the SAME quantization points as the kernel (tight check)."""
    N, Cin, H, W = x_nchw.shape
    HW = H * W
    hi = jax.lax.Precision.HIGHEST
    xq = x_nchw.reshape(N, Cin, HW).astype(jnp.bfloat16).astype(jnp.float32)
    Pt = params["Pt"].astype(jnp.float32)
    inv = params["inv"]
    Wf = params["W"].astype(jnp.float32)
    bias = params["bias"]                        # (Cout, B) f32
    Ut = params["Ut"].astype(jnp.float32)
    B, Cout, _ = Wf.shape
    pqm = Ut.shape[1]

    pooled = jnp.einsum('ncs,sq->ncq', xq, Pt, precision=hi) * inv[None]     # (N, Cin, B*pqm)
    outs = [xq]
    for b in range(B):
        p_b = pooled[:, :, b * pqm:(b + 1) * pqm].astype(jnp.bfloat16).astype(jnp.float32)
        z = jnp.einsum('oc,ncq->noq', Wf[b], p_b, precision=hi) + bias[None, :, b:b + 1]
        a = jnp.maximum(z, 0.0).astype(jnp.bfloat16).astype(jnp.float32)
        outs.append(jnp.einsum('noq,qs->nos', a, Ut[b], precision=hi))
    out = jnp.concatenate(outs, axis=1).astype(jnp.bfloat16)
    return out.reshape(N, -1, H, W)


def _reference_exact(x_nchw, master):
    """Exact f32 implementation of the PyTorch module semantics (loose check)."""
    N, Cin, H, W = x_nchw.shape
    HW = H * W
    hi = jax.lax.Precision.HIGHEST
    xf = x_nchw.reshape(N, Cin, HW).astype(jnp.float32)
    outs = [x_nchw.astype(jnp.float32)]
    for P, U, Wf, bias in zip(master["P_exact"], master["U_exact"],
                              master["W_folded"], master["bias"]):
        pooled = jnp.einsum('ncs,ps->ncp', xf, P, precision=hi)              # AvgPool2d(ceil_mode)
        z = jnp.einsum('oc,ncp->nop', Wf, pooled, precision=hi) + bias[None, :, None]
        a = jnp.maximum(z, 0.0)                                              # Conv1x1 + BN + ReLU
        up = jnp.einsum('nop,sp->nos', a, U, precision=hi)                   # bilinear align_corners
        outs.append(up.reshape(N, -1, H, W))
    return jnp.concatenate(outs, axis=1)


if __name__ == "__main__":
    in_size = (16, 16)
    in_channels, out_channels = 16, 8
    setting = (1, 2, 3, 6)          # classic PSPNet pyramid (exercises ceil-mode clipping)

    key = jax.random.PRNGKey(0)
    kx, kp = jax.random.split(key)
    x = jax.random.normal(kx, (2, in_channels, in_size[0], in_size[1]), jnp.float32)
    params, master = init_ppm_params(kp, in_size, in_channels, out_channels, setting)

    out = pyramid_pooling_module(x, params)
    out = jax.block_until_ready(out)

    Ctot = in_channels + len(setting) * out_channels
    assert out.shape == (2, Ctot, in_size[0], in_size[1]), out.shape
    assert out.dtype == jnp.bfloat16, out.dtype
    outf = out.astype(jnp.float32)

    # Tight check against a quantization-matched reference (catches layout/indexing bugs).
    ref_m = _reference_matched(x, params).astype(jnp.float32)
    err_m = float(jnp.max(jnp.abs(outf - ref_m)))
    assert jnp.allclose(outf, ref_m, atol=5e-3, rtol=2e-2), ("matched", err_m)

    # Loose check against the exact f32 PyTorch-semantics reference.
    ref_e = _reference_exact(x, master)
    err_e = float(jnp.max(jnp.abs(outf - ref_e)))
    assert jnp.allclose(outf, ref_e, atol=3e-2, rtol=3e-2), ("exact", err_e)

    print("KERNEL_OK")
</pallas_src>

<mosaic_0001>
module attributes {stable_mosaic.version = 11 : i64} {
  func.func @ppm_fused_kernel(%arg0: i32, %arg1: memref<1x16x256xbf16, #tpu.memory_space<vmem>>, %arg2: memref<256x144xbf16, #tpu.memory_space<vmem>>, %arg3: memref<1x144xf32, #tpu.memory_space<vmem>>, %arg4: memref<4x8x16xbf16, #tpu.memory_space<vmem>>, %arg5: memref<8x4xf32, #tpu.memory_space<vmem>>, %arg6: memref<4x36x256xbf16, #tpu.memory_space<vmem>>, %arg7: memref<1x48x256xbf16, #tpu.memory_space<vmem>>) attributes {dimension_semantics = [#tpu.dimension_semantics<parallel>], iteration_bounds = array<i64: 2>, scalar_prefetch = 0 : i64, scratch_operands = 0 : i64, tpu.core_type = #tpu.core_type<tc>, window_params = [{transform_indices = @transform_0, window_bounds = array<i64: 1, 16, 256>}, {pipeline_mode = #tpu.pipeline_mode<synchronous>, transform_indices = @transform_1, window_bounds = array<i64: 256, 144>}, {pipeline_mode = #tpu.pipeline_mode<synchronous>, transform_indices = @transform_2, window_bounds = array<i64: 1, 144>}, {pipeline_mode = #tpu.pipeline_mode<synchronous>, transform_indices = @transform_3, window_bounds = array<i64: 4, 8, 16>}, {pipeline_mode = #tpu.pipeline_mode<synchronous>, transform_indices = @transform_4, window_bounds = array<i64: 8, 4>}, {pipeline_mode = #tpu.pipeline_mode<synchronous>, transform_indices = @transform_5, window_bounds = array<i64: 4, 36, 256>}, {transform_indices = @transform_6, window_bounds = array<i64: 1, 48, 256>}]} {
    %c0 = arith.constant 0 : index
    %c0_0 = arith.constant 0 : index
    %c0_1 = arith.constant 0 : index
    %0 = vector.load %arg1[%c0, %c0_0, %c0_1] : memref<1x16x256xbf16, #tpu.memory_space<vmem>>, vector<1x16x256xbf16>
    %1 = vector.shape_cast %0 : vector<1x16x256xbf16> to vector<16x256xbf16>
    %c0_2 = arith.constant 0 : index
    %c0_3 = arith.constant 0 : index
    %c0_4 = arith.constant 0 : index
    %2 = vector.load %arg7[%c0_2, %c0_3, %c0_4] : memref<1x48x256xbf16, #tpu.memory_space<vmem>>, vector<1x16x256xbf16>
    %3 = vector.shape_cast %2 : vector<1x16x256xbf16> to vector<16x256xbf16>
    %4 = vector.shape_cast %1 : vector<16x256xbf16> to vector<1x16x256xbf16>
    tpu.vector_store %arg7[%c0_2, %c0_3, %c0_4], %4 {strides = array<i32>} : memref<1x48x256xbf16, #tpu.memory_space<vmem>>, vector<1x16x256xbf16>,
    %c0_5 = arith.constant 0 : index
    %c0_6 = arith.constant 0 : index
    %5 = vector.load %arg2[%c0_5, %c0_6] : memref<256x144xbf16, #tpu.memory_space<vmem>>, vector<256x144xbf16>
    %cst = arith.constant dense<0.000000e+00> : vector<16x144xf32>
    %6 = tpu.matmul %1, %5, %cst {dimension_numbers = #tpu.dot_dimension_numbers<[1], [0], [0], [1], [0, 0, 1, 1], [], []>} : vector<16x256xbf16>, vector<256x144xbf16>, vector<16x144xf32> -> vector<16x144xf32>
    %c0_7 = arith.constant 0 : index
    %c0_8 = arith.constant 0 : index
    %7 = vector.load %arg3[%c0_7, %c0_8] : memref<1x144xf32, #tpu.memory_space<vmem>>, vector<1x144xf32>
    %8 = vector.broadcast %7 : vector<1x144xf32> to vector<16x144xf32>
    %9 = arith.mulf %6, %8 : vector<16x144xf32>
    %10 = vector.extract_strided_slice %9 {offsets = [0, 0], sizes = [16, 36], strides = [1, 1]} : vector<16x144xf32> to vector<16x36xf32>
    %11 = arith.truncf %10 : vector<16x36xf32> to vector<16x36xbf16>
    %c0_9 = arith.constant 0 : index
    %c0_10 = arith.constant 0 : index
    %c0_11 = arith.constant 0 : index
    %12 = vector.load %arg4[%c0_9, %c0_10, %c0_11] : memref<4x8x16xbf16, #tpu.memory_space<vmem>>, vector<1x8x16xbf16>
    %13 = vector.shape_cast %12 : vector<1x8x16xbf16> to vector<8x16xbf16>
    %cst_12 = arith.constant dense<0.000000e+00> : vector<8x36xf32>
    %14 = tpu.matmul %13, %11, %cst_12 {dimension_numbers = #tpu.dot_dimension_numbers<[1], [0], [0], [1], [0, 0, 1, 1], [], []>} : vector<8x16xbf16>, vector<16x36xbf16>, vector<8x36xf32> -> vector<8x36xf32>
    %c0_13 = arith.constant 0 : index
    %c0_14 = arith.constant 0 : index
    %15 = vector.load %arg5[%c0_13, %c0_14] : memref<8x4xf32, #tpu.memory_space<vmem>>, vector<8x1xf32>
    %16 = vector.broadcast %15 : vector<8x1xf32> to vector<8x36xf32>
    %17 = arith.addf %14, %16 : vector<8x36xf32>
    %cst_15 = arith.constant 0.000000e+00 : f32
    %18 = vector.broadcast %cst_15 : f32 to vector<8x36xf32>
    %19 = arith.maximumf %17, %18 : vector<8x36xf32>
    %20 = arith.truncf %19 : vector<8x36xf32> to vector<8x36xbf16>
    %c0_16 = arith.constant 0 : index
    %c0_17 = arith.constant 0 : index
    %c0_18 = arith.constant 0 : index
    %21 = vector.load %arg6[%c0_16, %c0_17, %c0_18] : memref<4x36x256xbf16, #tpu.memory_space<vmem>>, vector<1x36x256xbf16>
    %22 = vector.shape_cast %21 : vector<1x36x256xbf16> to vector<36x256xbf16>
    %cst_19 = arith.constant dense<0.000000e+00> : vector<8x256xf32>
    %23 = tpu.matmul %20, %22, %cst_19 {dimension_numbers = #tpu.dot_dimension_numbers<[1], [0], [0], [1], [0, 0, 1, 1], [], []>} : vector<8x36xbf16>, vector<36x256xbf16>, vector<8x256xf32> -> vector<8x256xf32>
    %24 = arith.truncf %23 : vector<8x256xf32> to vector<8x256xbf16>
    %c0_20 = arith.constant 0 : index
    %c16 = arith.constant 16 : index
    %c0_21 = arith.constant 0 : index
    %25 = vector.load %arg7[%c0_20, %c16, %c0_21] : memref<1x48x256xbf16, #tpu.memory_space<vmem>>, vector<1x8x256xbf16>
    %26 = vector.shape_cast %25 : vector<1x8x256xbf16> to vector<8x256xbf16>
    %27 = vector.shape_cast %24 : vector<8x256xbf16> to vector<1x8x256xbf16>
    tpu.vector_store %arg7[%c0_20, %c16, %c0_21], %27 {strides = array<i32>} : memref<1x48x256xbf16, #tpu.memory_space<vmem>>, vector<1x8x256xbf16>,
    %28 = vector.extract_strided_slice %9 {offsets = [0, 36], sizes = [16, 36], strides = [1, 1]} : vector<16x144xf32> to vector<16x36xf32>
    %29 = arith.truncf %28 : vector<16x36xf32> to vector<16x36xbf16>
    %c1 = arith.constant 1 : index
    %c0_22 = arith.constant 0 : index
    %c0_23 = arith.constant 0 : index
    %30 = vector.load %arg4[%c1, %c0_22, %c0_23] : memref<4x8x16xbf16, #tpu.memory_space<vmem>>, vector<1x8x16xbf16>
    %31 = vector.shape_cast %30 : vector<1x8x16xbf16> to vector<8x16xbf16>
    %cst_24 = arith.constant dense<0.000000e+00> : vector<8x36xf32>
    %32 = tpu.matmul %31, %29, %cst_24 {dimension_numbers = #tpu.dot_dimension_numbers<[1], [0], [0], [1], [0, 0, 1, 1], [], []>} : vector<8x16xbf16>, vector<16x36xbf16>, vector<8x36xf32> -> vector<8x36xf32>
    %c0_25 = arith.constant 0 : index
    %c1_26 = arith.constant 1 : index
    %33 = vector.load %arg5[%c0_25, %c1_26] : memref<8x4xf32, #tpu.memory_space<vmem>>, vector<8x1xf32>
    %34 = vector.broadcast %33 : vector<8x1xf32> to vector<8x36xf32>
    %35 = arith.addf %32, %34 : vector<8x36xf32>
    %cst_27 = arith.constant 0.000000e+00 : f32
    %36 = vector.broadcast %cst_27 : f32 to vector<8x36xf32>
    %37 = arith.maximumf %35, %36 : vector<8x36xf32>
    %38 = arith.truncf %37 : vector<8x36xf32> to vector<8x36xbf16>
    %c1_28 = arith.constant 1 : index
    %c0_29 = arith.constant 0 : index
    %c0_30 = arith.constant 0 : index
    %39 = vector.load %arg6[%c1_28, %c0_29, %c0_30] : memref<4x36x256xbf16, #tpu.memory_space<vmem>>, vector<1x36x256xbf16>
    %40 = vector.shape_cast %39 : vector<1x36x256xbf16> to vector<36x256xbf16>
    %cst_31 = arith.constant dense<0.000000e+00> : vector<8x256xf32>
    %41 = tpu.matmul %38, %40, %cst_31 {dimension_numbers = #tpu.dot_dimension_numbers<[1], [0], [0], [1], [0, 0, 1, 1], [], []>} : vector<8x36xbf16>, vector<36x256xbf16>, vector<8x256xf32> -> vector<8x256xf32>
    %42 = arith.truncf %41 : vector<8x256xf32> to vector<8x256xbf16>
    %c0_32 = arith.constant 0 : index
    %c24 = arith.constant 24 : index
    %c0_33 = arith.constant 0 : index
    %43 = vector.load %arg7[%c0_32, %c24, %c0_33] : memref<1x48x256xbf16, #tpu.memory_space<vmem>>, vector<1x8x256xbf16>
    %44 = vector.shape_cast %43 : vector<1x8x256xbf16> to vector<8x256xbf16>
    %45 = vector.shape_cast %42 : vector<8x256xbf16> to vector<1x8x256xbf16>
    tpu.vector_store %arg7[%c0_32, %c24, %c0_33], %45 {strides = array<i32>} : memref<1x48x256xbf16, #tpu.memory_space<vmem>>, vector<1x8x256xbf16>,
    %46 = vector.extract_strided_slice %9 {offsets = [0, 72], sizes = [16, 36], strides = [1, 1]} : vector<16x144xf32> to vector<16x36xf32>
    %47 = arith.truncf %46 : vector<16x36xf32> to vector<16x36xbf16>
    %c2 = arith.constant 2 : index
    %c0_34 = arith.constant 0 : index
    %c0_35 = arith.constant 0 : index
    %48 = vector.load %arg4[%c2, %c0_34, %c0_35] : memref<4x8x16xbf16, #tpu.memory_space<vmem>>, vector<1x8x16xbf16>
    %49 = vector.shape_cast %48 : vector<1x8x16xbf16> to vector<8x16xbf16>
    %cst_36 = arith.constant dense<0.000000e+00> : vector<8x36xf32>
    %50 = tpu.matmul %49, %47, %cst_36 {dimension_numbers = #tpu.dot_dimension_numbers<[1], [0], [0], [1], [0, 0, 1, 1], [], []>} : vector<8x16xbf16>, vector<16x36xbf16>, vector<8x36xf32> -> vector<8x36xf32>
    %c0_37 = arith.constant 0 : index
    %c2_38 = arith.constant 2 : index
    %51 = vector.load %arg5[%c0_37, %c2_38] : memref<8x4xf32, #tpu.memory_space<vmem>>, vector<8x1xf32>
    %52 = vector.broadcast %51 : vector<8x1xf32> to vector<8x36xf32>
    %53 = arith.addf %50, %52 : vector<8x36xf32>
    %cst_39 = arith.constant 0.000000e+00 : f32
    %54 = vector.broadcast %cst_39 : f32 to vector<8x36xf32>
    %55 = arith.maximumf %53, %54 : vector<8x36xf32>
    %56 = arith.truncf %55 : vector<8x36xf32> to vector<8x36xbf16>
    %c2_40 = arith.constant 2 : index
    %c0_41 = arith.constant 0 : index
    %c0_42 = arith.constant 0 : index
    %57 = vector.load %arg6[%c2_40, %c0_41, %c0_42] : memref<4x36x256xbf16, #tpu.memory_space<vmem>>, vector<1x36x256xbf16>
    %58 = vector.shape_cast %57 : vector<1x36x256xbf16> to vector<36x256xbf16>
    %cst_43 = arith.constant dense<0.000000e+00> : vector<8x256xf32>
    %59 = tpu.matmul %56, %58, %cst_43 {dimension_numbers = #tpu.dot_dimension_numbers<[1], [0], [0], [1], [0, 0, 1, 1], [], []>} : vector<8x36xbf16>, vector<36x256xbf16>, vector<8x256xf32> -> vector<8x256xf32>
    %60 = arith.truncf %59 : vector<8x256xf32> to vector<8x256xbf16>
    %c0_44 = arith.constant 0 : index
    %c32 = arith.constant 32 : index
    %c0_45 = arith.constant 0 : index
    %61 = vector.load %arg7[%c0_44, %c32, %c0_45] : memref<1x48x256xbf16, #tpu.memory_space<vmem>>, vector<1x8x256xbf16>
    %62 = vector.shape_cast %61 : vector<1x8x256xbf16> to vector<8x256xbf16>
    %63 = vector.shape_cast %60 : vector<8x256xbf16> to vector<1x8x256xbf16>
    tpu.vector_store %arg7[%c0_44, %c32, %c0_45], %63 {strides = array<i32>} : memref<1x48x256xbf16, #tpu.memory_space<vmem>>, vector<1x8x256xbf16>,
    %64 = vector.extract_strided_slice %9 {offsets = [0, 108], sizes = [16, 36], strides = [1, 1]} : vector<16x144xf32> to vector<16x36xf32>
    %65 = arith.truncf %64 : vector<16x36xf32> to vector<16x36xbf16>
    %c3 = arith.constant 3 : index
    %c0_46 = arith.constant 0 : index
    %c0_47 = arith.constant 0 : index
    %66 = vector.load %arg4[%c3, %c0_46, %c0_47] : memref<4x8x16xbf16, #tpu.memory_space<vmem>>, vector<1x8x16xbf16>
    %67 = vector.shape_cast %66 : vector<1x8x16xbf16> to vector<8x16xbf16>
    %cst_48 = arith.constant dense<0.000000e+00> : vector<8x36xf32>
    %68 = tpu.matmul %67, %65, %cst_48 {dimension_numbers = #tpu.dot_dimension_numbers<[1], [0], [0], [1], [0, 0, 1, 1], [], []>} : vector<8x16xbf16>, vector<16x36xbf16>, vector<8x36xf32> -> vector<8x36xf32>
    %c0_49 = arith.constant 0 : index
    %c3_50 = arith.constant 3 : index
    %69 = vector.load %arg5[%c0_49, %c3_50] : memref<8x4xf32, #tpu.memory_space<vmem>>, vector<8x1xf32>
    %70 = vector.broadcast %69 : vector<8x1xf32> to vector<8x36xf32>
    %71 = arith.addf %68, %70 : vector<8x36xf32>
    %cst_51 = arith.constant 0.000000e+00 : f32
    %72 = vector.broadcast %cst_51 : f32 to vector<8x36xf32>
    %73 = arith.maximumf %71, %72 : vector<8x36xf32>
    %74 = arith.truncf %73 : vector<8x36xf32> to vector<8x36xbf16>
    %c3_52 = arith.constant 3 : index
    %c0_53 = arith.constant 0 : index
    %c0_54 = arith.constant 0 : index
    %75 = vector.load %arg6[%c3_52, %c0_53, %c0_54] : memref<4x36x256xbf16, #tpu.memory_space<vmem>>, vector<1x36x256xbf16>
    %76 = vector.shape_cast %75 : vector<1x36x256xbf16> to vector<36x256xbf16>
    %cst_55 = arith.constant dense<0.000000e+00> : vector<8x256xf32>
    %77 = tpu.matmul %74, %76, %cst_55 {dimension_numbers = #tpu.dot_dimension_numbers<[1], [0], [0], [1], [0, 0, 1, 1], [], []>} : vector<8x36xbf16>, vector<36x256xbf16>, vector<8x256xf32> -> vector<8x256xf32>
    %78 = arith.truncf %77 : vector<8x256xf32> to vector<8x256xbf16>
    %c0_56 = arith.constant 0 : index
    %c40 = arith.constant 40 : index
    %c0_57 = arith.constant 0 : index
    %79 = vector.load %arg7[%c0_56, %c40, %c0_57] : memref<1x48x256xbf16, #tpu.memory_space<vmem>>, vector<1x8x256xbf16>
    %80 = vector.shape_cast %79 : vector<1x8x256xbf16> to vector<8x256xbf16>
    %81 = vector.shape_cast %78 : vector<8x256xbf16> to vector<1x8x256xbf16>
    tpu.vector_store %arg7[%c0_56, %c40, %c0_57], %81 {strides = array<i32>} : memref<1x48x256xbf16, #tpu.memory_space<vmem>>, vector<1x8x256xbf16>,
    return
  }
  func.func @transform_0(%arg0: i32) -> (i32, i32, i32) {
    %c0_i32 = arith.constant 0 : i32
    %c0_i32_0 = arith.constant 0 : i32
    %c0_i32_1 = arith.constant 0 : i32
    return %arg0, %c0_i32, %c0_i32_0 : i32, i32, i32
  }
  func.func @transform_1(%arg0: i32) -> (i32, i32) {
    %c0_i32 = arith.constant 0 : i32
    %c0_i32_0 = arith.constant 0 : i32
    %c0_i32_1 = arith.constant 0 : i32
    return %c0_i32, %c0_i32_0 : i32, i32
  }
  func.func @transform_2(%arg0: i32) -> (i32, i32) {
    %c0_i32 = arith.constant 0 : i32
    %c0_i32_0 = arith.constant 0 : i32
    %c0_i32_1 = arith.constant 0 : i32
    return %c0_i32, %c0_i32_0 : i32, i32
  }
  func.func @transform_3(%arg0: i32) -> (i32, i32, i32) {
    %c0_i32 = arith.constant 0 : i32
    %c0_i32_0 = arith.constant 0 : i32
    %c0_i32_1 = arith.constant 0 : i32
    %c0_i32_2 = arith.constant 0 : i32
    return %c0_i32, %c0_i32_0, %c0_i32_1 : i32, i32, i32
  }
  func.func @transform_4(%arg0: i32) -> (i32, i32) {
    %c0_i32 = arith.constant 0 : i32
    %c0_i32_0 = arith.constant 0 : i32
    %c0_i32_1 = arith.constant 0 : i32
    return %c0_i32, %c0_i32_0 : i32, i32
  }
  func.func @transform_5(%arg0: i32) -> (i32, i32, i32) {
    %c0_i32 = arith.constant 0 : i32
    %c0_i32_0 = arith.constant 0 : i32
    %c0_i32_1 = arith.constant 0 : i32
    %c0_i32_2 = arith.constant 0 : i32
    return %c0_i32, %c0_i32_0, %c0_i32_1 : i32, i32, i32
  }
  func.func @transform_6(%arg0: i32) -> (i32, i32, i32) {
    %c0_i32 = arith.constant 0 : i32
    %c0_i32_0 = arith.constant 0 : i32
    %c0_i32_1 = arith.constant 0 : i32
    return %arg0, %c0_i32, %c0_i32_0 : i32, i32, i32
  }
}

</mosaic_0001>

<llo_original>
// kernel: tpu_custom_call.1
$region0: #{tpu_custom_call.1}
  #allocation0 [shape = 'u32[]', space=smem, size = 0x4, offset = 0x4, fixed_abs, tag = 'smem constant byte address 0x4 - core index']
  #allocation1 [shape = 'u32[72,128]{1,0:T(1,128)}', space=vmem, size = 0x9000, scoped, tag = 'internal scratch']
  %s0 = inlined_call_operand.vmem [shape: bf16[2,16,256], index: 0, kind: input, shape index: {}]
  %s1 = inlined_call_operand.vmem [shape: bf16[256,144], index: 1, kind: input, shape index: {}]
  %s2 = inlined_call_operand.vmem [shape: f32[1,144], index: 2, kind: input, shape index: {}]
  %s3 = inlined_call_operand.vmem [shape: bf16[4,8,16], index: 3, kind: input, shape index: {}]
  %s4 = inlined_call_operand.vmem [shape: f32[8,4], index: 4, kind: input, shape index: {}]
  %s5 = inlined_call_operand.vmem [shape: bf16[4,36,256], index: 5, kind: input, shape index: {}]
  %s6 = inlined_call_operand.hbm [shape: bf16[2,48,256], index: 6, kind: output, shape index: {}]
  %s7 = sld [smem:[#allocation0]]
  $region57: #{tpu_custom_call.1} parent=0
    _
  %s9 = ssub.s32 1, %s7
  %s10 = scalar_select 0, %s9, %s7
  $region1: #{tpu_custom_call.1} parent=0
    #allocation2 [shape = 'u8[49152]{0}', space=vmem, size = 0xc000, scoped, tag = 'output window, operand 0']
    #allocation3 [shape = 's32[2]{0}', space=sflag, size = 0x8, scoped, tag = 'scoped memory for tpu_custom_call.1']
    %11 = vsyncpa [#allocation3], 0
    %s12 = scalar_lea.sflag [#allocation3], 1
    %13 = vsyncpa %s12, 0
    loop: start=0, step=1, limit=4
    $region2: #{tpu_custom_call.1} parent=1 // loop_pre_header
      _
    $region3: #{tpu_custom_call.1} parent=1 // loop_header
      %s15 = sphi 0, %s19
      %p16 = scmp.ge.s32.totalorder %s15, 4
      %s25 = sphi 0, %s27
      %s28 = sphi 0, %s25
      %s29 = sphi 0, %s28
      %s45 = sphi 0, %s29
      %s49 = sphi 0, %s49
      %s51 = sphi 0, %s49
      %s52 = sphi 0, %s51
      %s66 = sphi 0, %s52
      %s70 = sphi 0, %s70
      %s72 = sphi 0, %s70
      %s73 = sphi 0, %s72
      %s87 = sphi 0, %s73
      %s91 = sphi 0, %s91
      %s93 = sphi 0, %s91
      %s94 = sphi 0, %s93
      %s108 = sphi 0, %s94
      %s112 = sphi 0, %s112
      %s114 = sphi 0, %s112
      %s115 = sphi 0, %s114
      %s129 = sphi 0, %s115
      %s133 = sphi 0, %s133
      %s135 = sphi 0, %s133
      %s136 = sphi 0, %s135
      %s150 = sphi 0, %s136
      %s156 = sphi 0, %s158
      %s159 = sphi 0, %s156
      %s160 = sphi 0, %s159
      %s176 = sphi 0, %s160
    $region4: #{tpu_custom_call.1} parent=1 // loop_header_branch
      %18 = sbr.rel (%p16) target = $region8
    $region5: #{tpu_custom_call.1} parent=1 // loop_body
      %s20 = ssub.s32 %s15, 1
      %s21 = ssub.s32 %s15, 2
      %s22 = sadd.s32 %s15, 1
      %s23 = ssub.s32 %s15, %s22
      %p24 = scmp.eq.s32.totalorder %s23, 0
      %s26 = sadd.s32 %s25, 1
      %s27 = scalar_select %p24, %s25, %s26
      %p30 = pneg %p24
      %p31 = scmp.eq.s32.totalorder %s15, 1
      %p32 = por %p30, %p31
      %p33 = scmp.ne.s32.totalorder %s25, %s28
      %p34 = scmp.eq.s32.totalorder %s15, 0
      %p35 = por %p33, %p34
      %p36 = scmp.ne.s32.totalorder %s25, %s28
      %p37 = scmp.eq.s32.totalorder %s20, 1
      %p38 = por %p36, %p37
      %p39 = scmp.ne.s32.totalorder %s28, %s29
      %p40 = scmp.eq.s32.totalorder %s20, 0
      %p41 = por %p39, %p40
      %p42 = scmp.ne.s32.totalorder %s28, %s29
      %p43 = scmp.eq.s32.totalorder %s21, 1
      %p44 = por %p42, %p43
      %p46 = scmp.ne.s32.totalorder %s29, %s45
      %p47 = scmp.eq.s32.totalorder %s21, 0
      %p48 = por %p46, %p47
      %s50 = sadd.s32 %s49, 1
      %p53 = scmp.eq.s32.totalorder %s15, 1
      %p54 = scmp.ne.s32.totalorder %s49, %s51
      %p55 = scmp.eq.s32.totalorder %s15, 0
      %p56 = por %p54, %p55
      %p57 = scmp.ne.s32.totalorder %s49, %s51
      %p58 = scmp.eq.s32.totalorder %s20, 1
      %p59 = por %p57, %p58
      %p60 = scmp.ne.s32.totalorder %s51, %s52
      %p61 = scmp.eq.s32.totalorder %s20, 0
      %p62 = por %p60, %p61
      %p63 = scmp.ne.s32.totalorder %s51, %s52
      %p64 = scmp.eq.s32.totalorder %s21, 1
      %p65 = por %p63, %p64
      %p67 = scmp.ne.s32.totalorder %s52, %s66
      %p68 = scmp.eq.s32.totalorder %s21, 0
      %p69 = por %p67, %p68
      %s71 = sadd.s32 %s70, 1
      %p74 = scmp.eq.s32.totalorder %s15, 1
      %p75 = scmp.ne.s32.totalorder %s70, %s72
      %p76 = scmp.eq.s32.totalorder %s15, 0
      %p77 = por %p75, %p76
      %p78 = scmp.ne.s32.totalorder %s70, %s72
      %p79 = scmp.eq.s32.totalorder %s20, 1
      %p80 = por %p78, %p79
      %p81 = scmp.ne.s32.totalorder %s72, %s73
      %p82 = scmp.eq.s32.totalorder %s20, 0
      %p83 = por %p81, %p82
      %p84 = scmp.ne.s32.totalorder %s72, %s73
      %p85 = scmp.eq.s32.totalorder %s21, 1
      %p86 = por %p84, %p85
      %p88 = scmp.ne.s32.totalorder %s73, %s87
      %p89 = scmp.eq.s32.totalorder %s21, 0
      %p90 = por %p88, %p89
      %s92 = sadd.s32 %s91, 1
      %p95 = scmp.eq.s32.totalorder %s15, 1
      %p96 = scmp.ne.s32.totalorder %s91, %s93
      %p97 = scmp.eq.s32.totalorder %s15, 0
      %p98 = por %p96, %p97
      %p99 = scmp.ne.s32.totalorder %s91, %s93
      %p100 = scmp.eq.s32.totalorder %s20, 1
      %p101 = por %p99, %p100
      %p102 = scmp.ne.s32.totalorder %s93, %s94
      %p103 = scmp.eq.s32.totalorder %s20, 0
      %p104 = por %p102, %p103
      %p105 = scmp.ne.s32.totalorder %s93, %s94
      %p106 = scmp.eq.s32.totalorder %s21, 1
      %p107 = por %p105, %p106
      %p109 = scmp.ne.s32.totalorder %s94, %s108
      %p110 = scmp.eq.s32.totalorder %s21, 0
      %p111 = por %p109, %p110
      %s113 = sadd.s32 %s112, 1
      %p116 = scmp.eq.s32.totalorder %s15, 1
      %p117 = scmp.ne.s32.totalorder %s112, %s114
      %p118 = scmp.eq.s32.totalorder %s15, 0
      %p119 = por %p117, %p118
      %p120 = scmp.ne.s32.totalorder %s112, %s114
      %p121 = scmp.eq.s32.totalorder %s20, 1
      %p122 = por %p120, %p121
      %p123 = scmp.ne.s32.totalorder %s114, %s115
      %p124 = scmp.eq.s32.totalorder %s20, 0
      %p125 = por %p123, %p124
      %p126 = scmp.ne.s32.totalorder %s114, %s115
      %p127 = scmp.eq.s32.totalorder %s21, 1
      %p128 = por %p126, %p127
      %p130 = scmp.ne.s32.totalorder %s115, %s129
      %p131 = scmp.eq.s32.totalorder %s21, 0
      %p132 = por %p130, %p131
      %s134 = sadd.s32 %s133, 1
      %p137 = scmp.eq.s32.totalorder %s15, 1
      %p138 = scmp.ne.s32.totalorder %s133, %s135
      %p139 = scmp.eq.s32.totalorder %s15, 0
      %p140 = por %p138, %p139
      %p141 = scmp.ne.s32.totalorder %s133, %s135
      %p142 = scmp.eq.s32.totalorder %s20, 1
      %p143 = por %p141, %p142
      %p144 = scmp.ne.s32.totalorder %s135, %s136
      %p145 = scmp.eq.s32.totalorder %s20, 0
      %p146 = por %p144, %p145
      %p147 = scmp.ne.s32.totalorder %s135, %s136
      %p148 = scmp.eq.s32.totalorder %s21, 1
      %p149 = por %p147, %p148
      %p151 = scmp.ne.s32.totalorder %s136, %s150
      %p152 = scmp.eq.s32.totalorder %s21, 0
      %p153 = por %p151, %p152
      %s154 = ssub.s32 %s15, %s22
      %p155 = scmp.eq.s32.totalorder %s154, 0
      %s157 = sadd.s32 %s156, 1
      %s158 = scalar_select %p155, %s156, %s157
      %p161 = pneg %p155
      %p162 = scmp.eq.s32.totalorder %s15, 1
      %p163 = por %p161, %p162
      %p164 = scmp.ne.s32.totalorder %s156, %s159
      %p165 = scmp.eq.s32.totalorder %s15, 0
      %p166 = por %p164, %p165
      %p167 = scmp.ne.s32.totalorder %s156, %s159
      %p168 = scmp.eq.s32.totalorder %s20, 1
      %p169 = por %p167, %p168
      %p170 = scmp.ne.s32.totalorder %s159, %s160
      %p171 = scmp.eq.s32.totalorder %s20, 0
      %p172 = por %p170, %p171
      %p173 = scmp.ne.s32.totalorder %s159, %s160
      %p174 = scmp.eq.s32.totalorder %s21, 1
      %p175 = por %p173, %p174
      %p177 = scmp.ne.s32.totalorder %s160, %s176
      %p178 = scmp.eq.s32.totalorder %s21, 0
      %p179 = por %p177, %p178
      %p180 = scmp.le.s32.totalorder 1, %s15
      %p181 = scmp.lt.s32.totalorder %s15, 3
      %p182 = pnand %p180, %p181
      %p183 = pneg %p182
      // Predicated region
      $region9: #{tpu_custom_call.1} parent=5 // pred_check
        _
      $region10: #{tpu_custom_call.1} parent=5 // pred_check_branch
        %185 = sbr.rel (%p182) target = $region12
      $region11: #{tpu_custom_call.1} parent=5 // pred_region
        %s186 = ssub.s32 %s15, 1
        // Predicated region
        $region13: #{tpu_custom_call.1} parent=11 // pred_check
          %p187 = pneg %p62
        $region14: #{tpu_custom_call.1} parent=11 // pred_check_branch
          %189 = sbr.rel (%p187) target = $region16
        $region15: #{tpu_custom_call.1} parent=11 // pred_region
          _
        $region16: #{tpu_custom_call.1} parent=11 // pred_fallthru
          _
        // Predicated region
        $region17: #{tpu_custom_call.1} parent=11 // pred_check
          %p190 = pneg %p83
        $region18: #{tpu_custom_call.1} parent=11 // pred_check_branch
          %192 = sbr.rel (%p190) target = $region20
        $region19: #{tpu_custom_call.1} parent=11 // pred_region
          _
        $region20: #{tpu_custom_call.1} parent=11 // pred_fallthru
          _
        // Predicated region
        $region21: #{tpu_custom_call.1} parent=11 // pred_check
          %p193 = pneg %p104
        $region22: #{tpu_custom_call.1} parent=11 // pred_check_branch
          %195 = sbr.rel (%p193) target = $region24
        $region23: #{tpu_custom_call.1} parent=11 // pred_region
          _
        $region24: #{tpu_custom_call.1} parent=11 // pred_fallthru
          _
        // Predicated region
        $region25: #{tpu_custom_call.1} parent=11 // pred_check
          %p196 = pneg %p125
        $region26: #{tpu_custom_call.1} parent=11 // pred_check_branch
          %198 = sbr.rel (%p196) target = $region28
        $region27: #{tpu_custom_call.1} parent=11 // pred_region
          _
        $region28: #{tpu_custom_call.1} parent=11 // pred_fallthru
          _
        // Predicated region
        $region29: #{tpu_custom_call.1} parent=11 // pred_check
          %p199 = pneg %p146
        $region30: #{tpu_custom_call.1} parent=11 // pred_check_branch
          %201 = sbr.rel (%p199) target = $region32
        $region31: #{tpu_custom_call.1} parent=11 // pred_region
          _
        $region32: #{tpu_custom_call.1} parent=11 // pred_fallthru
          _
      $region12: #{tpu_custom_call.1} parent=5 // pred_fallthru
        _
      %p202 = scmp.lt.s32.totalorder %s15, 2
      // Predicated region
      $region33: #{tpu_custom_call.1} parent=5 // pred_check
        %p203 = pneg %p202
      $region34: #{tpu_custom_call.1} parent=5 // pred_check_branch
        %205 = sbr.rel (%p203) target = $region36
      $region35: #{tpu_custom_call.1} parent=5 // pred_region
        // Predicated region
        $region37: #{tpu_custom_call.1} parent=35 // pred_check
          %p206 = pneg %p35
        $region38: #{tpu_custom_call.1} parent=35 // pred_check_branch
          %208 = sbr.rel (%p206) target = $region40
        $region39: #{tpu_custom_call.1} parent=35 // pred_region
          %p209 = scmp.lt.s32.totalorder %s15, 1
          %s210 = scalar_select %p209, %s15, 1
          %s211 = smul.addr %s210, 4
          %s212 = smul.addr %s211, 4
          %s213 = scalar_lea.vmem %s0, %s212
        $region40: #{tpu_custom_call.1} parent=35 // pred_fallthru
          _
      $region36: #{tpu_custom_call.1} parent=5 // pred_fallthru
        _
      %p214 = scmp.le.s32.totalorder 1, %s15
      %p215 = scmp.lt.s32.totalorder %s15, 3
      %p216 = pnand %p214, %p215
      %p217 = pneg %p216
      // Predicated region
      $region41: #{tpu_custom_call.1} parent=5 // pred_check
        _
      $region42: #{tpu_custom_call.1} parent=5 // pred_check_branch
        %219 = sbr.rel (%p216) target = $region44
      $region43: #{tpu_custom_call.1} parent=5 // pred_region
        %s220 = ssub.s32 %s15, 1
        %p221 = scmp.lt.s32.totalorder %s20, 1
        %s222 = scalar_select %p221, %s20, 1
        %s223 = smul.addr %s222, 4
        %s224 = smul.addr %s223, 4
        %s225 = scalar_lea.vmem %s0, %s224
        %p226 = pneg %p41
        %p227 = pneg %p38
        %p228 = pneg %p62
        %p229 = pneg %p59
        %p230 = pneg %p83
        %p231 = pneg %p80
        %p232 = pneg %p104
        %p233 = pneg %p101
        %p234 = pneg %p125
        %p235 = pneg %p122
        %p236 = pneg %p146
        %p237 = pneg %p143
        %p238 = pneg %p172
        %p239 = pneg %p169
        %s240 = sand.u32 %s159, 1
        %s241 = scalar_lea.sflag [#allocation3], %s240
        %s242 = sand.u32 %s159, 1
        %s243 = smul.addr %s242, 48
        %s244 = scalar_lea.vmem [#allocation2], %s243
        %p245 = scmp.lt.s32.totalorder %s20, 1
        %s246 = scalar_select %p245, %s20, 1
        %s247 = smul.addr %s246, 4
        %s248 = smul.addr %s247, 4
        %s249 = scalar_lea.vmem %s0, %s248
        %v251 = vld [vmem:[%s249] sm:$0xff]
        %v252 = vld [vmem:[%s249 + $0x8] sm:$0xff]
        %253 = vst [vmem:[%s244] sm:$0xff] %v251
        %254 = vst [vmem:[%s244 + $0x8] sm:$0xff] %v252
        %v255 = vld [vmem:[%s1] sm:$0xff]
        %v256 = vld [vmem:[%s1 + $0x8] sm:$0xff]
        %v257 = vld [vmem:[%s1 + $0x10] sm:$0xff]
        %v258 = vld [vmem:[%s1 + $0x18] sm:$0xff]
        %v259 = vld [vmem:[%s1 + $0x20] sm:$0xff]
        %v260 = vld [vmem:[%s1 + $0x28] sm:$0xff]
        %v261 = vld [vmem:[%s1 + $0x30] sm:$0xff]
        %v262 = vld [vmem:[%s1 + $0x38] sm:$0xff]
        %v263 = vld [vmem:[%s1 + $0x40] sm:$0xff]
        %v264 = vld [vmem:[%s1 + $0x48] sm:$0xff]
        %v265 = vld [vmem:[%s1 + $0x50] sm:$0xff]
        %v266 = vld [vmem:[%s1 + $0x58] sm:$0xff]
        %v267 = vld [vmem:[%s1 + $0x60] sm:$0xff]
        %v268 = vld [vmem:[%s1 + $0x68] sm:$0xff]
        %v269 = vld [vmem:[%s1 + $0x70] sm:$0xff]
        %v270 = vld [vmem:[%s1 + $0x78] sm:$0xff]
        %v271 = vld [vmem:[%s1 + $0x80] sm:$0xff]
        %v272 = vld [vmem:[%s1 + $0x88] sm:$0xff]
        %v273 = vld [vmem:[%s1 + $0x90] sm:$0xff]
        %v274 = vld [vmem:[%s1 + $0x98] sm:$0xff]
        %v275 = vld [vmem:[%s1 + $0xa0] sm:$0xff]
        %v276 = vld [vmem:[%s1 + $0xa8] sm:$0xff]
        %v277 = vld [vmem:[%s1 + $0xb0] sm:$0xff]
        %v278 = vld [vmem:[%s1 + $0xb8] sm:$0xff]
        %v279 = vld [vmem:[%s1 + $0xc0] sm:$0xff]
        %v280 = vld [vmem:[%s1 + $0xc8] sm:$0xff]
        %v281 = vld [vmem:[%s1 + $0xd0] sm:$0xff]
        %v282 = vld [vmem:[%s1 + $0xd8] sm:$0xff]
        %v283 = vld [vmem:[%s1 + $0xe0] sm:$0xff]
        %v284 = vld [vmem:[%s1 + $0xe8] sm:$0xff]
        %v285 = vld [vmem:[%s1 + $0xf0] sm:$0xff]
        %v286 = vld [vmem:[%s1 + $0xf8] sm:$0xff]
        %v289 = vunpack.c.l.b16 %v251
        %v290 = vunpack.c.h.b16 %v251
        %v291 = vunpack.c.l.b16 %v252
        %v292 = vunpack.c.h.b16 %v252
        %v293 = vpack.c.b16 %v291, %v289
        %v294 = vpack.c.b16 %v292, %v290
        %v329 = vunpack.c.l.b16 %v255
        %v330 = vunpack.c.h.b16 %v255
        %v331 = vunpack.c.l.b16 %v256
        %v332 = vunpack.c.h.b16 %v256
        %v333 = vunpack.c.l.b16 %v257
        %v334 = vunpack.c.h.b16 %v257
        %v335 = vunpack.c.l.b16 %v258
        %v336 = vunpack.c.h.b16 %v258
        %v337 = vunpack.c.l.b16 %v259
        %v338 = vunpack.c.h.b16 %v259
        %v339 = vunpack.c.l.b16 %v260
        %v340 = vunpack.c.h.b16 %v260
        %v341 = vunpack.c.l.b16 %v261
        %v342 = vunpack.c.h.b16 %v261
        %v343 = vunpack.c.l.b16 %v262
        %v344 = vunpack.c.h.b16 %v262
        %v345 = vunpack.c.l.b16 %v263
        %v346 = vunpack.c.h.b16 %v263
        %v347 = vunpack.c.l.b16 %v264
        %v348 = vunpack.c.h.b16 %v264
        %v349 = vunpack.c.l.b16 %v265
        %v350 = vunpack.c.h.b16 %v265
        %v351 = vunpack.c.l.b16 %v266
        %v352 = vunpack.c.h.b16 %v266
        %v353 = vunpack.c.l.b16 %v267
        %v354 = vunpack.c.h.b16 %v267
        %v355 = vunpack.c.l.b16 %v268
        %v356 = vunpack.c.h.b16 %v268
        %v357 = vunpack.c.l.b16 %v269
        %v358 = vunpack.c.h.b16 %v269
        %v359 = vunpack.c.l.b16 %v270
        %v360 = vunpack.c.h.b16 %v270
        %v361 = vunpack.c.l.b16 %v271
        %v362 = vunpack.c.h.b16 %v271
        %v363 = vunpack.c.l.b16 %v272
        %v364 = vunpack.c.h.b16 %v272
        %v365 = vunpack.c.l.b16 %v273
        %v366 = vunpack.c.h.b16 %v273
        %v367 = vunpack.c.l.b16 %v274
        %v368 = vunpack.c.h.b16 %v274
        %v369 = vunpack.c.l.b16 %v275
        %v370 = vunpack.c.h.b16 %v275
        %v371 = vunpack.c.l.b16 %v276
        %v372 = vunpack.c.h.b16 %v276
        %v373 = vunpack.c.l.b16 %v277
        %v374 = vunpack.c.h.b16 %v277
        %v375 = vunpack.c.l.b16 %v278
        %v376 = vunpack.c.h.b16 %v278
        %v377 = vunpack.c.l.b16 %v279
        %v378 = vunpack.c.h.b16 %v279
        %v379 = vunpack.c.l.b16 %v280
        %v380 = vunpack.c.h.b16 %v280
        %v381 = vunpack.c.l.b16 %v281
        %v382 = vunpack.c.h.b16 %v281
        %v383 = vunpack.c.l.b16 %v282
        %v384 = vunpack.c.h.b16 %v282
        %v385 = vunpack.c.l.b16 %v283
        %v386 = vunpack.c.h.b16 %v283
        %v387 = vunpack.c.l.b16 %v284
        %v388 = vunpack.c.h.b16 %v284
        %v389 = vunpack.c.l.b16 %v285
        %v390 = vunpack.c.h.b16 %v285
        %v391 = vunpack.c.l.b16 %v286
        %v392 = vunpack.c.h.b16 %v286
        %v393 = vpack.c.b16 %v331, %v329
        %v394 = vpack.c.b16 %v332, %v330
        %v395 = vpack.c.b16 %v335, %v333
        %v396 = vpack.c.b16 %v336, %v334
        %v397 = vpack.c.b16 %v339, %v337
        %v398 = vpack.c.b16 %v340, %v338
        %v399 = vpack.c.b16 %v343, %v341
        %v400 = vpack.c.b16 %v344, %v342
        %v401 = vpack.c.b16 %v347, %v345
        %v402 = vpack.c.b16 %v348, %v346
        %v403 = vpack.c.b16 %v351, %v349
        %v404 = vpack.c.b16 %v352, %v350
        %v405 = vpack.c.b16 %v355, %v353
        %v406 = vpack.c.b16 %v356, %v354
        %v407 = vpack.c.b16 %v359, %v357
        %v408 = vpack.c.b16 %v360, %v358
        %v409 = vpack.c.b16 %v363, %v361
        %v410 = vpack.c.b16 %v364, %v362
        %v411 = vpack.c.b16 %v367, %v365
        %v412 = vpack.c.b16 %v368, %v366
        %v413 = vpack.c.b16 %v371, %v369
        %v414 = vpack.c.b16 %v372, %v370
        %v415 = vpack.c.b16 %v375, %v373
        %v416 = vpack.c.b16 %v376, %v374
        %v417 = vpack.c.b16 %v379, %v377
        %v418 = vpack.c.b16 %v380, %v378
        %v419 = vpack.c.b16 %v383, %v381
        %v420 = vpack.c.b16 %v384, %v382
        %v421 = vpack.c.b16 %v387, %v385
        %v422 = vpack.c.b16 %v388, %v386
        %v423 = vpack.c.b16 %v391, %v389
        %v424 = vpack.c.b16 %v392, %v390
        %457 = vmatpush.bf16.msra.mxu0 %v407
        %458 = vmatpush.bf16.msra.mxu0 %v405
        %459 = vmatpush.bf16.msra.mxu0 %v403
        %460 = vmatpush.bf16.msra.mxu0 %v401
        %461 = vmatpush.bf16.msra.mxu0 %v399
        %462 = vmatpush.bf16.msra.mxu0 %v397
        %463 = vmatpush.bf16.msra.mxu0 %v395
        %464 = vmatpush.bf16.msra.mxu0 %v393
        %465 = vmatmul.bf16.gmra.mxu0 %v293
        %v466 = vpop.f32.mrf.mxu0
        %v467 = vadd.f32 0.0, %v466
        %v468 = vpop.f32.mrf.mxu0
        %v469 = vadd.f32 0.0, %v468
        %470 = vdwg.mxu0
        %471 = vmatpush.bf16.msra.mxu0 %v423
        %472 = vmatpush.bf16.msra.mxu0 %v421
        %473 = vmatpush.bf16.msra.mxu0 %v419
        %474 = vmatpush.bf16.msra.mxu0 %v417
        %475 = vmatpush.bf16.msra.mxu0 %v415
        %476 = vmatpush.bf16.msra.mxu0 %v413
        %477 = vmatpush.bf16.msra.mxu0 %v411
        %478 = vmatpush.bf16.msra.mxu0 %v409
        %479 = vmatmul.bf16.gmra.mxu0 %v294
        %v480 = vpop.f32.mrf.mxu0
        %v481 = vadd.f32 %v467, %v480
        %v482 = vpop.f32.mrf.mxu0
        %v483 = vadd.f32 %v469, %v482
        %484 = vdwg.mxu0
        %485 = vmatpush.bf16.msra.mxu0 %v408
        %486 = vmatpush.bf16.msra.mxu0 %v406
        %487 = vmatpush.bf16.msra.mxu0 %v404
        %488 = vmatpush.bf16.msra.mxu0 %v402
        %489 = vmatpush.bf16.msra.mxu0 %v400
        %490 = vmatpush.bf16.msra.mxu0 %v398
        %491 = vmatpush.bf16.msra.mxu0 %v396
        %492 = vmatpush.bf16.msra.mxu0 %v394
        %493 = vmatmul.bf16.gmra.mxu0 %v293
        %v494 = vpop.f32.mrf.mxu0
        %v495 = vadd.f32 0.0, %v494
        %v496 = vpop.f32.mrf.mxu0
        %v497 = vadd.f32 0.0, %v496
        %498 = vdwg.mxu0
        %499 = vmatpush.bf16.msra.mxu0 %v424
        %500 = vmatpush.bf16.msra.mxu0 %v422
        %501 = vmatpush.bf16.msra.mxu0 %v420
        %502 = vmatpush.bf16.msra.mxu0 %v418
        %503 = vmatpush.bf16.msra.mxu0 %v416
        %504 = vmatpush.bf16.msra.mxu0 %v414
        %505 = vmatpush.bf16.msra.mxu0 %v412
        %506 = vmatpush.bf16.msra.mxu0 %v410
        %507 = vmatmul.bf16.gmra.mxu0 %v294
        %v508 = vpop.f32.mrf.mxu0
        %v509 = vadd.f32 %v495, %v508
        %v510 = vpop.f32.mrf.mxu0
        %v511 = vadd.f32 %v497, %v510
        %512 = vdwg.mxu0
        %v513 = vld [vmem:[%s2] sm:$0x3]
        %v515 = vperm.slane %v513, 0
        %v516 = vperm.slane %v513, 1
        %v519 = vmul.f32 %v481, %v515
        %v520 = vmul.f32 %v509, %v516
        %v521 = vmul.f32 %v483, %v515
        %v522 = vmul.f32 %v511, %v516
        %v523 = vpack.c.bf16 %v521, %v519
        %v524 = vld [vmem:[%s3] sm:$0xf]
        %v525 = vld [vmem:[%s4] sm:$0xff]
        %527 = vset.pattern.permute.xlu0 0
        %528 = vperm.xlu0 %527, %v525
        %v529 = vpop.permute.xlu0 %528
        %vm531 = vcmask 130048
        %v533 = vsel %vm531, %v524, 0
        %535 = vmatpush.bf16.msra.mxu0 0
        %536 = vmatpush.bf16.msra.mxu0 0
        %537 = vmatpush.bf16.msra.mxu0 0
        %538 = vmatpush.bf16.msra.mxu0 0
        %539 = vmatpush.bf16.msra.mxu0 0
        %540 = vmatpush.bf16.msra.mxu0 0
        %541 = vmatpush.bf16.msra.mxu0 0
        %542 = vmatpush.bf16.msra.mxu0 %v523
        %543 = vmatmul.bf16.gmra.mxu0 %v533
        %v544 = vpop.f32.mrf.mxu0
        %v545 = vadd.f32 %v529, %v544
        %v546 = vpop.f32.mrf.mxu0
        %547 = vdwg.mxu0
        %v548 = vmax.f32 %v545, 0.0
        %v549 = vpack.c.bf16 %v548, %v548
        %v550 = vld [vmem:[%s5] sm:$0xff]
        %v551 = vld [vmem:[%s5 + $0x8] sm:$0xff]
        %v552 = vld [vmem:[%s5 + $0x10] sm:$0xff]
        %v553 = vld [vmem:[%s5 + $0x18] sm:$0xff]
        %v554 = vld [vmem:[%s5 + $0x20] sm:$0x33]
        %v560 = vunpack.c.l.b16 %v550
        %v561 = vunpack.c.h.b16 %v550
        %v562 = vunpack.c.l.b16 %v551
        %v563 = vunpack.c.h.b16 %v551
        %v564 = vunpack.c.l.b16 %v552
        %v565 = vunpack.c.h.b16 %v552
        %v566 = vunpack.c.l.b16 %v553
        %v567 = vunpack.c.h.b16 %v553
        %v568 = vunpack.c.l.b16 %v554
        %v569 = vunpack.c.h.b16 %v554
        %v570 = vpack.c.b16 %v562, %v560
        %v571 = vpack.c.b16 %v563, %v561
        %v572 = vpack.c.b16 %v566, %v564
        %v573 = vpack.c.b16 %v567, %v565
        %v574 = vpack.c.b16 %v568, %v568
        %v575 = vpack.c.b16 %v569, %v569
        %vm580 = vcmask 293888
        %v582 = vsel %vm580, %v549, 0
        %vm584 = vcmask 1041408
        %v586 = vsel %vm584, %v574, 0
        %v589 = vsel %vm584, %v575, 0
        %591 = vmatpush.bf16.msra.mxu0 0
        %592 = vmatpush.bf16.msra.mxu0 0
        %593 = vmatpush.bf16.msra.mxu0 0
        %594 = vmatpush.bf16.msra.mxu0 0
        %595 = vmatpush.bf16.msra.mxu0 0
        %596 = vmatpush.bf16.msra.mxu0 %v586
        %597 = vmatpush.bf16.msra.mxu0 %v572
        %598 = vmatpush.bf16.msra.mxu0 %v570
        %599 = vmatmul.bf16.gmra.mxu0 %v582
        %v600 = vpop.f32.mrf.mxu0
        %v601 = vadd.f32 0.0, %v600
        %v602 = vpop.f32.mrf.mxu0
        %603 = vdwg.mxu0
        %604 = vmatpush.bf16.msra.mxu0 0
        %605 = vmatpush.bf16.msra.mxu0 0
        %606 = vmatpush.bf16.msra.mxu0 0
        %607 = vmatpush.bf16.msra.mxu0 0
        %608 = vmatpush.bf16.msra.mxu0 0
        %609 = vmatpush.bf16.msra.mxu0 %v589
        %610 = vmatpush.bf16.msra.mxu0 %v573
        %611 = vmatpush.bf16.msra.mxu0 %v571
        %612 = vmatmul.bf16.gmra.mxu0 %v582
        %v613 = vpop.f32.mrf.mxu0
        %v614 = vadd.f32 0.0, %v613
        %v615 = vpop.f32.mrf.mxu0
        %616 = vdwg.mxu0
        %v617 = vpack.c.bf16 %v614, %v601
        %618 = vst [vmem:[%s244 + $0x10] sm:$0xff] %v617
        %s619 = scalar_lea.vmem %s3, 4
        %v620 = vld [vmem:[%s619] sm:$0xf]
        %v621 = vld [vmem:[%s4] sm:$0xff]
        %623 = vset.pattern.permute.xlu0 1
        %624 = vperm.xlu0 %623, %v621
        %v625 = vpop.permute.xlu0 %624
        %628 = vrot.lane.b32.xlu0 %v523, 92
        %v629 = vpop.permute.xlu0 %628
        %v632 = vsel %vm531, %v620, 0
        %634 = vmatpush.bf16.msra.mxu0 0
        %635 = vmatpush.bf16.msra.mxu0 0
        %636 = vmatpush.bf16.msra.mxu0 0
        %637 = vmatpush.bf16.msra.mxu0 0
        %638 = vmatpush.bf16.msra.mxu0 0
        %639 = vmatpush.bf16.msra.mxu0 0
        %640 = vmatpush.bf16.msra.mxu0 0
        %641 = vmatpush.bf16.msra.mxu0 %v629
        %642 = vmatmul.bf16.gmra.mxu0 %v632
        %v643 = vpop.f32.mrf.mxu0
        %v644 = vadd.f32 %v625, %v643
        %v645 = vpop.f32.mrf.mxu0
        %646 = vdwg.mxu0
        %v647 = vmax.f32 %v644, 0.0
        %v648 = vpack.c.bf16 %v647, %v647
        %s649 = scalar_lea.vmem %s5, 40
        %v650 = vld [vmem:[%s649] sm:$0xff]
        %v651 = vld [vmem:[%s649 + $0x8] sm:$0xff]
        %v652 = vld [vmem:[%s649 + $0x10] sm:$0xff]
        %v653 = vld [vmem:[%s649 + $0x18] sm:$0xff]
        %v654 = vld [vmem:[%s649 + $0x20] sm:$0x33]
        %v660 = vunpack.c.l.b16 %v650
        %v661 = vunpack.c.h.b16 %v650
        %v662 = vunpack.c.l.b16 %v651
        %v663 = vunpack.c.h.b16 %v651
        %v664 = vunpack.c.l.b16 %v652
        %v665 = vunpack.c.h.b16 %v652
        %v666 = vunpack.c.l.b16 %v653
        %v667 = vunpack.c.h.b16 %v653
        %v668 = vunpack.c.l.b16 %v654
        %v669 = vunpack.c.h.b16 %v654
        %v670 = vpack.c.b16 %v662, %v660
        %v671 = vpack.c.b16 %v663, %v661
        %v672 = vpack.c.b16 %v666, %v664
        %v673 = vpack.c.b16 %v667, %v665
        %v674 = vpack.c.b16 %v668, %v668
        %v675 = vpack.c.b16 %v669, %v669
        %v681 = vsel %vm580, %v648, 0
        %v684 = vsel %vm584, %v674, 0
        %v687 = vsel %vm584, %v675, 0
        %689 = vmatpush.bf16.msra.mxu0 0
        %690 = vmatpush.bf16.msra.mxu0 0
        %691 = vmatpush.bf16.msra.mxu0 0
        %692 = vmatpush.bf16.msra.mxu0 0
        %693 = vmatpush.bf16.msra.mxu0 0
        %694 = vmatpush.bf16.msra.mxu0 %v684
        %695 = vmatpush.bf16.msra.mxu0 %v672
        %696 = vmatpush.bf16.msra.mxu0 %v670
        %697 = vmatmul.bf16.gmra.mxu0 %v681
        %v698 = vpop.f32.mrf.mxu0
        %v699 = vadd.f32 0.0, %v698
        %v700 = vpop.f32.mrf.mxu0
        %701 = vdwg.mxu0
        %702 = vmatpush.bf16.msra.mxu0 0
        %703 = vmatpush.bf16.msra.mxu0 0
        %704 = vmatpush.bf16.msra.mxu0 0
        %705 = vmatpush.bf16.msra.mxu0 0
        %706 = vmatpush.bf16.msra.mxu0 0
        %707 = vmatpush.bf16.msra.mxu0 %v687
        %708 = vmatpush.bf16.msra.mxu0 %v673
        %709 = vmatpush.bf16.msra.mxu0 %v671
        %710 = vmatmul.bf16.gmra.mxu0 %v681
        %v711 = vpop.f32.mrf.mxu0
        %v712 = vadd.f32 0.0, %v711
        %v713 = vpop.f32.mrf.mxu0
        %714 = vdwg.mxu0
        %v715 = vpack.c.bf16 %v712, %v699
        %716 = vst [vmem:[%s244 + $0x18] sm:$0xff] %v715
        %s717 = scalar_lea.vmem %s3, 8
        %v718 = vld [vmem:[%s717] sm:$0xf]
        %v719 = vld [vmem:[%s4] sm:$0xff]
        %721 = vset.pattern.permute.xlu0 2
        %722 = vperm.xlu0 %721, %v719
        %v723 = vpop.permute.xlu0 %722
        %725 = vrot.lane.b32.xlu0 %v523, 56
        %v726 = vpop.permute.xlu0 %725
        %v729 = vsel %vm531, %v718, 0
        %731 = vmatpush.bf16.msra.mxu0 0
        %732 = vmatpush.bf16.msra.mxu0 0
        %733 = vmatpush.bf16.msra.mxu0 0
        %734 = vmatpush.bf16.msra.mxu0 0
        %735 = vmatpush.bf16.msra.mxu0 0
        %736 = vmatpush.bf16.msra.mxu0 0
        %737 = vmatpush.bf16.msra.mxu0 0
        %738 = vmatpush.bf16.msra.mxu0 %v726
        %739 = vmatmul.bf16.gmra.mxu0 %v729
        %v740 = vpop.f32.mrf.mxu0
        %v741 = vadd.f32 %v723, %v740
        %v742 = vpop.f32.mrf.mxu0
        %743 = vdwg.mxu0
        %v744 = vmax.f32 %v741, 0.0
        %v745 = vpack.c.bf16 %v744, %v744
        %s746 = scalar_lea.vmem %s5, 80
        %v747 = vld [vmem:[%s746] sm:$0xff]
        %v748 = vld [vmem:[%s746 + $0x8] sm:$0xff]
        %v749 = vld [vmem:[%s746 + $0x10] sm:$0xff]
        %v750 = vld [vmem:[%s746 + $0x18] sm:$0xff]
        %v751 = vld [vmem:[%s746 + $0x20] sm:$0x33]
        %v757 = vunpack.c.l.b16 %v747
        %v758 = vunpack.c.h.b16 %v747
        %v759 = vunpack.c.l.b16 %v748
        %v760 = vunpack.c.h.b16 %v748
        %v761 = vunpack.c.l.b16 %v749
        %v762 = vunpack.c.h.b16 %v749
        %v763 = vunpack.c.l.b16 %v750
        %v764 = vunpack.c.h.b16 %v750
        %v765 = vunpack.c.l.b16 %v751
        %v766 = vunpack.c.h.b16 %v751
        %v767 = vpack.c.b16 %v759, %v757
        %v768 = vpack.c.b16 %v760, %v758
        %v769 = vpack.c.b16 %v763, %v761
        %v770 = vpack.c.b16 %v764, %v762
        %v771 = vpack.c.b16 %v765, %v765
        %v772 = vpack.c.b16 %v766, %v766
        %v778 = vsel %vm580, %v745, 0
        %v781 = vsel %vm584, %v771, 0
        %v784 = vsel %vm584, %v772, 0
        %786 = vmatpush.bf16.msra.mxu0 0
        %787 = vmatpush.bf16.msra.mxu0 0
        %788 = vmatpush.bf16.msra.mxu0 0
        %789 = vmatpush.bf16.msra.mxu0 0
        %790 = vmatpush.bf16.msra.mxu0 0
        %791 = vmatpush.bf16.msra.mxu0 %v781
        %792 = vmatpush.bf16.msra.mxu0 %v769
        %793 = vmatpush.bf16.msra.mxu0 %v767
        %794 = vmatmul.bf16.gmra.mxu0 %v778
        %v795 = vpop.f32.mrf.mxu0
        %v796 = vadd.f32 0.0, %v795
        %v797 = vpop.f32.mrf.mxu0
        %798 = vdwg.mxu0
        %799 = vmatpush.bf16.msra.mxu0 0
        %800 = vmatpush.bf16.msra.mxu0 0
        %801 = vmatpush.bf16.msra.mxu0 0
        %802 = vmatpush.bf16.msra.mxu0 0
        %803 = vmatpush.bf16.msra.mxu0 0
        %804 = vmatpush.bf16.msra.mxu0 %v784
        %805 = vmatpush.bf16.msra.mxu0 %v770
        %806 = vmatpush.bf16.msra.mxu0 %v768
        %807 = vmatmul.bf16.gmra.mxu0 %v778
        %v808 = vpop.f32.mrf.mxu0
        %v809 = vadd.f32 0.0, %v808
        %v810 = vpop.f32.mrf.mxu0
        %811 = vdwg.mxu0
        %v812 = vpack.c.bf16 %v809, %v796
        %813 = vst [vmem:[%s244 + $0x20] sm:$0xff] %v812
        %v814 = vpack.c.bf16 %v522, %v520
        %s815 = scalar_lea.vmem %s3, 12
        %v816 = vld [vmem:[%s815] sm:$0xf]
        %v817 = vld [vmem:[%s4] sm:$0xff]
        %819 = vset.pattern.permute.xlu0 3
        %820 = vperm.xlu0 %819, %v817
        %v821 = vpop.permute.xlu0 %820
        %824 = vrot.lane.b32.xlu0 %v523, 20
        %v825 = vpop.permute.xlu0 %824
        %826 = vrot.lane.b32.xlu0 %v814, 20
        %v827 = vpop.permute.xlu0 %826
        %vm828 = vcmask 162816
        %v829 = vsel %vm828, %v825, %v827
        %v832 = vsel %vm531, %v816, 0
        %834 = vmatpush.bf16.msra.mxu0 0
        %835 = vmatpush.bf16.msra.mxu0 0
        %836 = vmatpush.bf16.msra.mxu0 0
        %837 = vmatpush.bf16.msra.mxu0 0
        %838 = vmatpush.bf16.msra.mxu0 0
        %839 = vmatpush.bf16.msra.mxu0 0
        %840 = vmatpush.bf16.msra.mxu0 0
        %841 = vmatpush.bf16.msra.mxu0 %v829
        %842 = vmatmul.bf16.gmra.mxu0 %v832
        %v843 = vpop.f32.mrf.mxu0
        %v844 = vadd.f32 %v821, %v843
        %v845 = vpop.f32.mrf.mxu0
        %846 = vdwg.mxu0
        %v847 = vmax.f32 %v844, 0.0
        %v848 = vpack.c.bf16 %v847, %v847
        %s849 = scalar_lea.vmem %s5, 120
        %v850 = vld [vmem:[%s849] sm:$0xff]
        %v851 = vld [vmem:[%s849 + $0x8] sm:$0xff]
        %v852 = vld [vmem:[%s849 + $0x10] sm:$0xff]
        %v853 = vld [vmem:[%s849 + $0x18] sm:$0xff]
        %v854 = vld [vmem:[%s849 + $0x20] sm:$0x33]
        %v860 = vunpack.c.l.b16 %v850
        %v861 = vunpack.c.h.b16 %v850
        %v862 = vunpack.c.l.b16 %v851
        %v863 = vunpack.c.h.b16 %v851
        %v864 = vunpack.c.l.b16 %v852
        %v865 = vunpack.c.h.b16 %v852
        %v866 = vunpack.c.l.b16 %v853
        %v867 = vunpack.c.h.b16 %v853
        %v868 = vunpack.c.l.b16 %v854
        %v869 = vunpack.c.h.b16 %v854
        %v870 = vpack.c.b16 %v862, %v860
        %v871 = vpack.c.b16 %v863, %v861
        %v872 = vpack.c.b16 %v866, %v864
        %v873 = vpack.c.b16 %v867, %v865
        %v874 = vpack.c.b16 %v868, %v868
        %v875 = vpack.c.b16 %v869, %v869
        %v881 = vsel %vm580, %v848, 0
        %v884 = vsel %vm584, %v874, 0
        %v887 = vsel %vm584, %v875, 0
        %889 = vmatpush.bf16.msra.mxu0 0
        %890 = vmatpush.bf16.msra.mxu0 0
        %891 = vmatpush.bf16.msra.mxu0 0
        %892 = vmatpush.bf16.msra.mxu0 0
        %893 = vmatpush.bf16.msra.mxu0 0
        %894 = vmatpush.bf16.msra.mxu0 %v884
        %895 = vmatpush.bf16.msra.mxu0 %v872
        %896 = vmatpush.bf16.msra.mxu0 %v870
        %897 = vmatmul.bf16.gmra.mxu0 %v881
        %v898 = vpop.f32.mrf.mxu0
        %v899 = vadd.f32 0.0, %v898
        %v900 = vpop.f32.mrf.mxu0
        %901 = vdwg.mxu0
        %902 = vmatpush.bf16.msra.mxu0 0
        %903 = vmatpush.bf16.msra.mxu0 0
        %904 = vmatpush.bf16.msra.mxu0 0
        %905 = vmatpush.bf16.msra.mxu0 0
        %906 = vmatpush.bf16.msra.mxu0 0
        %907 = vmatpush.bf16.msra.mxu0 %v887
        %908 = vmatpush.bf16.msra.mxu0 %v873
        %909 = vmatpush.bf16.msra.mxu0 %v871
        %910 = vmatmul.bf16.gmra.mxu0 %v881
        %v911 = vpop.f32.mrf.mxu0
        %v912 = vadd.f32 0.0, %v911
        %v913 = vpop.f32.mrf.mxu0
        %914 = vdwg.mxu0
        %v915 = vpack.c.bf16 %v912, %v899
        %916 = vst [vmem:[%s244 + $0x28] sm:$0xff] %v915
        %s917 = sand.u32 %s159, 1
        %s918 = scalar_lea.sflag [#allocation3], %s917
        %s919 = sand.u32 %s159, 1
        %s920 = smul.addr %s919, 48
        %s921 = scalar_lea.vmem [#allocation2], %s920
        // Predicated region
        $region45: #{tpu_custom_call.1} parent=43 // pred_check
          %p922 = pneg %p169
        $region46: #{tpu_custom_call.1} parent=43 // pred_check_branch
          %924 = sbr.rel (%p922) target = $region48
        $region47: #{tpu_custom_call.1} parent=43 // pred_region
          %926 = vsyncadd %s918, 0
          %s927 = smul.addr %s20, 12
          %s928 = smul.addr %s927, 4
          %s929 = scalar_lea.hbm %s6, %s928
          %s930 = sshll.u32 %s921, 4
          %s931 = int_to_ptr.vmem [resolvable:$true] %s930
          %s932 = sshll.u32 %s929, 4
          %s933 = int_to_ptr.hbm [resolvable:$true] %s932
          %938 = dma.vmem_to_hbm [thread:$0]  %s931, 768, %s933, %s918, 128, 128, 8
        $region48: #{tpu_custom_call.1} parent=43 // pred_fallthru
          _
      $region44: #{tpu_custom_call.1} parent=5 // pred_fallthru
        _
      %p939 = scmp.le.s32.totalorder 2, %s15
      // Predicated region
      $region49: #{tpu_custom_call.1} parent=5 // pred_check
        %p940 = pneg %p939
      $region50: #{tpu_custom_call.1} parent=5 // pred_check_branch
        %942 = sbr.rel (%p940) target = $region52
      $region51: #{tpu_custom_call.1} parent=5 // pred_region
        %s943 = ssub.s32 %s15, 2
        // Predicated region
        $region53: #{tpu_custom_call.1} parent=51 // pred_check
          %p944 = pneg %p175
        $region54: #{tpu_custom_call.1} parent=51 // pred_check_branch
          %946 = sbr.rel (%p944) target = $region56
        $region55: #{tpu_custom_call.1} parent=51 // pred_region
          %s947 = sand.u32 %s160, 1
          %s948 = scalar_lea.sflag [#allocation3], %s947
          %s949 = sand.u32 %s160, 1
          %s950 = smul.addr %s949, 48
          %s951 = scalar_lea.vmem [#allocation2], %s950
          %953 = dma.done %s948, 768
        $region56: #{tpu_custom_call.1} parent=51 // pred_fallthru
          _
      $region52: #{tpu_custom_call.1} parent=5 // pred_fallthru
        _
    $region6: #{tpu_custom_call.1} parent=1 // loop_footer
      %s19 = sadd.s32 1, %s15
    $region7: #{tpu_custom_call.1} parent=1 // loop_footer_branch
      %14 = sbr.rel target = $region3
    $region8: #{tpu_custom_call.1} parent=1 // loop_exit
      _
    %954 = vsyncpa [#allocation3], 1
    %s955 = scalar_lea.sflag [#allocation3], 1
    %956 = vsyncpa %s955, 1

</llo_original>
